<compile_context>
chip_gen: v6e
topology: v6e:2x2x1
jax: 0.10.0
libtpu: 0.0.40
codegen_flags: <defaults>
</compile_context>

<pallas_src>
import jax
import jax.numpy as jnp
from jax.experimental import pallas as pl
from jax.experimental.pallas import tpu as pltpu

_LANE = 128
_SUBLANE = 8


def _round_up(x, m):
    return ((x + m - 1) // m) * m


def _tversky_kernel(pred_ref, tgt_ref, out_ref, tp_acc, fp_acc, fn_acc):
    # pred_ref, tgt_ref: (tile_rows, 128) tile of one batch element.
    # out_ref: (3, 128) per-batch lane-wise partial sums [tp; fp; fn].
    # *_acc: (1, 128) f32 VMEM accumulators, resident across the k axis.
    k = pl.program_id(1)
    nk = pl.num_programs(1)

    @pl.when(k == 0)
    def _init():
        tp_acc[...] = jnp.zeros_like(tp_acc)
        fp_acc[...] = jnp.zeros_like(fp_acc)
        fn_acc[...] = jnp.zeros_like(fn_acc)

    one = jnp.float32(1.0)
    p = pred_ref[...].astype(jnp.float32)
    t = tgt_ref[...].astype(jnp.float32)

    # Masked products exactly as in the PyTorch forward (no sum cancellation).
    tp_acc[...] += jnp.sum(p * t, axis=0, keepdims=True)
    fp_acc[...] += jnp.sum(p * (one - t), axis=0, keepdims=True)
    fn_acc[...] += jnp.sum((one - p) * t, axis=0, keepdims=True)

    @pl.when(k == nk - 1)
    def _finalize():
        out_ref[...] = jnp.concatenate(
            [tp_acc[...], fp_acc[...], fn_acc[...]], axis=0)


def tversky_loss(pred, target, *, tile_rows=2048):
    """pred: (B, 1, D, H, W), target: (B, D, H, W) -> scalar f32 loss."""
    pred = jnp.squeeze(pred, axis=1)                    # (B, D, H, W)
    B = pred.shape[0]
    p2 = pred.reshape(B, -1)                            # native dtype, no upcast
    t2 = target.reshape(B, -1)
    N = p2.shape[1]

    # Lane-dense layout: (B, R, 128); pad rows so the grid divides evenly.
    R = _round_up(N, _LANE) // _LANE
    tr = max(_SUBLANE, min(_round_up(tile_rows, _SUBLANE),
                           _round_up(R, _SUBLANE)))
    R_pad = _round_up(R, tr)
    K = R_pad // tr
    N_pad = R_pad * _LANE
    if N_pad != N:
        # Zero padding contributes nothing to tp / fp / fn.
        p2 = jnp.pad(p2, ((0, 0), (0, N_pad - N)))
        t2 = jnp.pad(t2, ((0, 0), (0, N_pad - N)))
    p3 = p2.reshape(B, R_pad, _LANE)
    t3 = t2.reshape(B, R_pad, _LANE)

    partials = pl.pallas_call(
        _tversky_kernel,
        out_shape=jax.ShapeDtypeStruct((B, 3, _LANE), jnp.float32),
        grid=(B, K),
        in_specs=[
            pl.BlockSpec((None, tr, _LANE), lambda b, k: (b, k, 0)),
            pl.BlockSpec((None, tr, _LANE), lambda b, k: (b, k, 0)),
        ],
        out_specs=pl.BlockSpec((None, 3, _LANE), lambda b, k: (b, 0, 0)),
        scratch_shapes=[pltpu.VMEM((1, _LANE), jnp.float32)] * 3,
        compiler_params=pltpu.CompilerParams(
            dimension_semantics=("parallel", "arbitrary")),
    )(p3, t3)

    # Tiny epilogue: (B, 3, 128) -> scalar loss.
    sums = jnp.sum(partials, axis=2)                    # (B, 3)
    tp, fp, fn = sums[:, 0], sums[:, 1], sums[:, 2]
    smooth = jnp.float32(1.0)
    dice = tp / (tp + jnp.float32(0.3) * fp + jnp.float32(0.7) * fn + smooth)
    return jnp.clip(jnp.mean(jnp.float32(1.0) - dice), 0.0, 2.0)


def _tversky_loss_ref(pred, target):
    # Pure-JAX reference mirroring the PyTorch forward exactly.
    p = jnp.squeeze(pred, axis=1).astype(jnp.float32)
    t = target.astype(jnp.float32)
    smooth = 1.0
    tp = (p * t).sum(axis=(1, 2, 3))
    fp = (p * (1 - t)).sum(axis=(1, 2, 3))
    fn = ((1 - p) * t).sum(axis=(1, 2, 3))
    dice = tp / (tp + 0.3 * fp + 0.7 * fn + smooth)
    return jnp.clip((1 - dice).mean(), 0.0, 2.0)


if __name__ == "__main__":
    key = jax.random.PRNGKey(0)
    k1, k2 = jax.random.split(key)

    B, D, H, W = 2, 8, 16, 16
    pred = jax.nn.sigmoid(jax.random.normal(k1, (B, 1, D, H, W), jnp.float32))
    target = jax.random.bernoulli(k2, 0.4, (B, D, H, W)).astype(jnp.float32)

    ref = _tversky_loss_ref(pred, target)
    loss_fn = jax.jit(tversky_loss, static_argnames=("tile_rows",))

    # Default tile (single reduction step at this small shape).
    loss = loss_fn(pred, target)
    jax.block_until_ready(loss)
    assert jnp.allclose(loss, ref, atol=1e-5, rtol=1e-5), (loss, ref)

    # Small tiles to exercise the multi-step (K > 1) accumulation path.
    loss_tiled = loss_fn(pred, target, tile_rows=8)
    jax.block_until_ready(loss_tiled)
    assert jnp.allclose(loss_tiled, ref, atol=1e-5, rtol=1e-5), (loss_tiled, ref)

    print("KERNEL_OK")
</pallas_src>

<mosaic_0001>
module attributes {stable_mosaic.version = 11 : i64} {
  func.func @_tversky_kernel(%arg0: i32, %arg1: i32, %arg2: memref<1x16x128xf32, #tpu.memory_space<vmem>>, %arg3: memref<1x16x128xf32, #tpu.memory_space<vmem>>, %arg4: memref<1x3x128xf32, #tpu.memory_space<vmem>>, %arg5: memref<1x128xf32, #tpu.memory_space<vmem>>, %arg6: memref<1x128xf32, #tpu.memory_space<vmem>>, %arg7: memref<1x128xf32, #tpu.memory_space<vmem>>) attributes {dimension_semantics = [#tpu.dimension_semantics<parallel>, #tpu.dimension_semantics<arbitrary>], iteration_bounds = array<i64: 2, 1>, scalar_prefetch = 0 : i64, scratch_operands = 3 : i64, tpu.core_type = #tpu.core_type<tc>, window_params = [{transform_indices = @transform_0, window_bounds = array<i64: 1, 16, 128>}, {transform_indices = @transform_1, window_bounds = array<i64: 1, 16, 128>}, {transform_indices = @transform_2, window_bounds = array<i64: 1, 3, 128>}]} {
    %c0_i32 = arith.constant 0 : i32
    %0 = arith.cmpi eq, %arg1, %c0_i32 : i32
    %1 = arith.extui %0 : i1 to i32
    %c0_i32_0 = arith.constant 0 : i32
    %2 = arith.cmpi ne, %1, %c0_i32_0 : i32
    scf.if %2 {
      %cst_24 = arith.constant 0.000000e+00 : f32
      %32 = vector.broadcast %cst_24 : f32 to vector<1x128xf32>
      %c0_25 = arith.constant 0 : index
      %c0_26 = arith.constant 0 : index
      %33 = vector.load %arg5[%c0_25, %c0_26] : memref<1x128xf32, #tpu.memory_space<vmem>>, vector<1x128xf32>
      tpu.vector_store %arg5[%c0_25, %c0_26], %32 {strides = array<i32>} : memref<1x128xf32, #tpu.memory_space<vmem>>, vector<1x128xf32>,
      %cst_27 = arith.constant 0.000000e+00 : f32
      %34 = vector.broadcast %cst_27 : f32 to vector<1x128xf32>
      %c0_28 = arith.constant 0 : index
      %c0_29 = arith.constant 0 : index
      %35 = vector.load %arg6[%c0_28, %c0_29] : memref<1x128xf32, #tpu.memory_space<vmem>>, vector<1x128xf32>
      tpu.vector_store %arg6[%c0_28, %c0_29], %34 {strides = array<i32>} : memref<1x128xf32, #tpu.memory_space<vmem>>, vector<1x128xf32>,
      %cst_30 = arith.constant 0.000000e+00 : f32
      %36 = vector.broadcast %cst_30 : f32 to vector<1x128xf32>
      %c0_31 = arith.constant 0 : index
      %c0_32 = arith.constant 0 : index
      %37 = vector.load %arg7[%c0_31, %c0_32] : memref<1x128xf32, #tpu.memory_space<vmem>>, vector<1x128xf32>
      tpu.vector_store %arg7[%c0_31, %c0_32], %36 {strides = array<i32>} : memref<1x128xf32, #tpu.memory_space<vmem>>, vector<1x128xf32>,
    } else {
    }
    %c0 = arith.constant 0 : index
    %c0_1 = arith.constant 0 : index
    %c0_2 = arith.constant 0 : index
    %3 = vector.load %arg2[%c0, %c0_1, %c0_2] : memref<1x16x128xf32, #tpu.memory_space<vmem>>, vector<1x16x128xf32>
    %4 = vector.shape_cast %3 : vector<1x16x128xf32> to vector<16x128xf32>
    %c0_3 = arith.constant 0 : index
    %c0_4 = arith.constant 0 : index
    %c0_5 = arith.constant 0 : index
    %5 = vector.load %arg3[%c0_3, %c0_4, %c0_5] : memref<1x16x128xf32, #tpu.memory_space<vmem>>, vector<1x16x128xf32>
    %6 = vector.shape_cast %5 : vector<1x16x128xf32> to vector<16x128xf32>
    %c0_6 = arith.constant 0 : index
    %c0_7 = arith.constant 0 : index
    %7 = vector.load %arg5[%c0_6, %c0_7] : memref<1x128xf32, #tpu.memory_space<vmem>>, vector<1x128xf32>
    %8 = arith.mulf %4, %6 : vector<16x128xf32>
    %cst = arith.constant dense<0.000000e+00> : vector<128xf32>
    %9 = vector.multi_reduction <add>, %8, %cst [0] : vector<16x128xf32> to vector<128xf32>
    %10 = vector.shape_cast %9 : vector<128xf32> to vector<1x128xf32>
    %11 = arith.addf %7, %10 : vector<1x128xf32>
    %c0_8 = arith.constant 0 : index
    %c0_9 = arith.constant 0 : index
    %12 = vector.load %arg5[%c0_8, %c0_9] : memref<1x128xf32, #tpu.memory_space<vmem>>, vector<1x128xf32>
    tpu.vector_store %arg5[%c0_8, %c0_9], %11 {strides = array<i32>} : memref<1x128xf32, #tpu.memory_space<vmem>>, vector<1x128xf32>,
    %c0_10 = arith.constant 0 : index
    %c0_11 = arith.constant 0 : index
    %13 = vector.load %arg6[%c0_10, %c0_11] : memref<1x128xf32, #tpu.memory_space<vmem>>, vector<1x128xf32>
    %cst_12 = arith.constant 1.000000e+00 : f32
    %14 = vector.broadcast %cst_12 : f32 to vector<16x128xf32>
    %15 = arith.subf %14, %6 : vector<16x128xf32>
    %16 = arith.mulf %4, %15 : vector<16x128xf32>
    %cst_13 = arith.constant dense<0.000000e+00> : vector<128xf32>
    %17 = vector.multi_reduction <add>, %16, %cst_13 [0] : vector<16x128xf32> to vector<128xf32>
    %18 = vector.shape_cast %17 : vector<128xf32> to vector<1x128xf32>
    %19 = arith.addf %13, %18 : vector<1x128xf32>
    %c0_14 = arith.constant 0 : index
    %c0_15 = arith.constant 0 : index
    %20 = vector.load %arg6[%c0_14, %c0_15] : memref<1x128xf32, #tpu.memory_space<vmem>>, vector<1x128xf32>
    tpu.vector_store %arg6[%c0_14, %c0_15], %19 {strides = array<i32>} : memref<1x128xf32, #tpu.memory_space<vmem>>, vector<1x128xf32>,
    %c0_16 = arith.constant 0 : index
    %c0_17 = arith.constant 0 : index
    %21 = vector.load %arg7[%c0_16, %c0_17] : memref<1x128xf32, #tpu.memory_space<vmem>>, vector<1x128xf32>
    %cst_18 = arith.constant 1.000000e+00 : f32
    %22 = vector.broadcast %cst_18 : f32 to vector<16x128xf32>
    %23 = arith.subf %22, %4 : vector<16x128xf32>
    %24 = arith.mulf %23, %6 : vector<16x128xf32>
    %cst_19 = arith.constant dense<0.000000e+00> : vector<128xf32>
    %25 = vector.multi_reduction <add>, %24, %cst_19 [0] : vector<16x128xf32> to vector<128xf32>
    %26 = vector.shape_cast %25 : vector<128xf32> to vector<1x128xf32>
    %27 = arith.addf %21, %26 : vector<1x128xf32>
    %c0_20 = arith.constant 0 : index
    %c0_21 = arith.constant 0 : index
    %28 = vector.load %arg7[%c0_20, %c0_21] : memref<1x128xf32, #tpu.memory_space<vmem>>, vector<1x128xf32>
    tpu.vector_store %arg7[%c0_20, %c0_21], %27 {strides = array<i32>} : memref<1x128xf32, #tpu.memory_space<vmem>>, vector<1x128xf32>,
    %c0_i32_22 = arith.constant 0 : i32
    %29 = arith.cmpi eq, %arg1, %c0_i32_22 : i32
    %30 = arith.extui %29 : i1 to i32
    %c0_i32_23 = arith.constant 0 : i32
    %31 = arith.cmpi ne, %30, %c0_i32_23 : i32
    scf.if %31 {
      %c0_24 = arith.constant 0 : index
      %c0_25 = arith.constant 0 : index
      %32 = vector.load %arg5[%c0_24, %c0_25] : memref<1x128xf32, #tpu.memory_space<vmem>>, vector<1x128xf32>
      %c0_26 = arith.constant 0 : index
      %c0_27 = arith.constant 0 : index
      %33 = vector.load %arg6[%c0_26, %c0_27] : memref<1x128xf32, #tpu.memory_space<vmem>>, vector<1x128xf32>
      %c0_28 = arith.constant 0 : index
      %c0_29 = arith.constant 0 : index
      %34 = vector.load %arg7[%c0_28, %c0_29] : memref<1x128xf32, #tpu.memory_space<vmem>>, vector<1x128xf32>
      %35 = tpu.concatenate %32, %33, %34 in 0 : vector<1x128xf32>, vector<1x128xf32>, vector<1x128xf32> -> vector<3x128xf32>
      %c0_30 = arith.constant 0 : index
      %c0_31 = arith.constant 0 : index
      %c0_32 = arith.constant 0 : index
      %36 = vector.load %arg4[%c0_30, %c0_31, %c0_32] : memref<1x3x128xf32, #tpu.memory_space<vmem>>, vector<1x3x128xf32>
      %37 = vector.shape_cast %36 : vector<1x3x128xf32> to vector<3x128xf32>
      %38 = vector.shape_cast %35 : vector<3x128xf32> to vector<1x3x128xf32>
      tpu.vector_store %arg4[%c0_30, %c0_31, %c0_32], %38 {strides = array<i32>} : memref<1x3x128xf32, #tpu.memory_space<vmem>>, vector<1x3x128xf32>,
    } else {
    }
    return
  }
  func.func @transform_0(%arg0: i32, %arg1: i32) -> (i32, i32, i32) {
    %c0_i32 = arith.constant 0 : i32
    %c0_i32_0 = arith.constant 0 : i32
    return %arg0, %arg1, %c0_i32 : i32, i32, i32
  }
  func.func @transform_1(%arg0: i32, %arg1: i32) -> (i32, i32, i32) {
    %c0_i32 = arith.constant 0 : i32
    %c0_i32_0 = arith.constant 0 : i32
    return %arg0, %arg1, %c0_i32 : i32, i32, i32
  }
  func.func @transform_2(%arg0: i32, %arg1: i32) -> (i32, i32, i32) {
    %c0_i32 = arith.constant 0 : i32
    %c0_i32_0 = arith.constant 0 : i32
    %c0_i32_1 = arith.constant 0 : i32
    return %arg0, %c0_i32, %c0_i32_0 : i32, i32, i32
  }
}

</mosaic_0001>

<llo_original>
// kernel: squeeze.4
$region0: #{squeeze.4}
  %s0 = inlined_call_operand.hbm [shape: f32[2,1,8,16,16], index: 0, kind: input, shape index: {}]
  %s1 = inlined_call_operand.vmem [shape: f32[2,16,128], index: 1, kind: output, shape index: {}]
  $region1: #{squeeze.4} parent=0
    #allocation0 [shape = 'u8[131072]{0}', space=vmem, size = 0x20000, scoped, tag = 'operand span for operand 0']
    #allocation1 [shape = 's32[1]{0}', space=sflag, size = 0x4, scoped, tag = 'scoped memory for squeeze.4']
    %2 = vsyncpa [#allocation1], 0
    %s4 = ssub.s32 4096, 4096
    %5 = vsyncadd [#allocation1], %s4
    %s7 = sshll.u32 [#allocation0], 4
    %s8 = int_to_ptr.vmem [resolvable:$true] %s7
    %10 = dma.hbm_to_vmem [thread:$0]  %s0, 4096, %s8, [#allocation1]
    %11 = dma.done [#allocation1], 4096
    %v12 = vld [vmem:[#allocation0] ss:$8 sm:$0xf]
    %v13 = vld [vmem:[#allocation0] ss:$8 sm:$0xf0]
    %vm14 = vcmask 1047556
    %v15 = vsel %vm14, %v13, %v12
    %vm16 = vcmask 130048
    %17 = vst.msk [vmem:[%s1] sm:$0xff] %vm16, %v15
    %s18 = scalar_lea.vmem [#allocation0], 64
    %v19 = vld [vmem:[%s18] ss:$8 sm:$0xf]
    %s20 = scalar_lea.vmem [#allocation0], 64
    %v21 = vld [vmem:[%s20] ss:$8 sm:$0xf0]
    %vm22 = vcmask 1047556
    %v23 = vsel %vm22, %v21, %v19
    %vm24 = vcmask 130048
    %s25 = scalar_lea.vmem %s1, 8
    %26 = vst.msk [vmem:[%s25] sm:$0xff] %vm24, %v23
    %s27 = scalar_lea.vmem [#allocation0], 128
    %v28 = vld [vmem:[%s27] ss:$8 sm:$0xf]
    %s29 = scalar_lea.vmem [#allocation0], 128
    %v30 = vld [vmem:[%s29] ss:$8 sm:$0xf0]
    %vm31 = vcmask 1047556
    %v32 = vsel %vm31, %v30, %v28
    %vm33 = vcmask 130048
    %s34 = scalar_lea.vmem %s1, 16
    %35 = vst.msk [vmem:[%s34] sm:$0xff] %vm33, %v32
    %s36 = scalar_lea.vmem [#allocation0], 192
    %v37 = vld [vmem:[%s36] ss:$8 sm:$0xf]
    %s38 = scalar_lea.vmem [#allocation0], 192
    %v39 = vld [vmem:[%s38] ss:$8 sm:$0xf0]
    %vm40 = vcmask 1047556
    %v41 = vsel %vm40, %v39, %v37
    %vm42 = vcmask 130048
    %s43 = scalar_lea.vmem %s1, 24
    %44 = vst.msk [vmem:[%s43] sm:$0xff] %vm42, %v41
    %s45 = scalar_lea.vmem [#allocation0], 7
    %v46 = vld [vmem:[%s45] ss:$8 sm:$0xf]
    %s47 = scalar_lea.vmem [#allocation0], 7
    %v48 = vld [vmem:[%s47] ss:$8 sm:$0xf0]
    %vm49 = vcmask 1047556
    %v50 = vsel %vm49, %v48, %v46
    %51 = vrot.lane.b32.xlu0 %v50, 112
    %v52 = vpop.permute.xlu0 %51
    %vm53 = vcmask 1048448
    %54 = vst.msk [vmem:[%s1] sm:$0xff] %vm53, %v52
    %s55 = scalar_lea.vmem [#allocation0], 71
    %v56 = vld [vmem:[%s55] ss:$8 sm:$0xf]
    %s57 = scalar_lea.vmem [#allocation0], 71
    %v58 = vld [vmem:[%s57] ss:$8 sm:$0xf0]
    %vm59 = vcmask 1047556
    %v60 = vsel %vm59, %v58, %v56
    %61 = vrot.lane.b32.xlu0 %v60, 112
    %v62 = vpop.permute.xlu0 %61
    %vm63 = vcmask 1048448
    %s64 = scalar_lea.vmem %s1, 8
    %65 = vst.msk [vmem:[%s64] sm:$0xff] %vm63, %v62
    %s66 = scalar_lea.vmem [#allocation0], 135
    %v67 = vld [vmem:[%s66] ss:$8 sm:$0xf]
    %s68 = scalar_lea.vmem [#allocation0], 135
    %v69 = vld [vmem:[%s68] ss:$8 sm:$0xf0]
    %vm70 = vcmask 1047556
    %v71 = vsel %vm70, %v69, %v67
    %72 = vrot.lane.b32.xlu0 %v71, 112
    %v73 = vpop.permute.xlu0 %72
    %vm74 = vcmask 1048448
    %s75 = scalar_lea.vmem %s1, 16
    %76 = vst.msk [vmem:[%s75] sm:$0xff] %vm74, %v73
    %s77 = scalar_lea.vmem [#allocation0], 199
    %v78 = vld [vmem:[%s77] ss:$8 sm:$0xf]
    %s79 = scalar_lea.vmem [#allocation0], 199
    %v80 = vld [vmem:[%s79] ss:$8 sm:$0xf0]
    %vm81 = vcmask 1047556
    %v82 = vsel %vm81, %v80, %v78
    %83 = vrot.lane.b32.xlu0 %v82, 112
    %v84 = vpop.permute.xlu0 %83
    %vm85 = vcmask 1048448
    %s86 = scalar_lea.vmem %s1, 24
    %87 = vst.msk [vmem:[%s86] sm:$0xff] %vm85, %v84
    %s88 = scalar_lea.vmem [#allocation0], 6
    %v89 = vld [vmem:[%s88] ss:$8 sm:$0xf]
    %s90 = scalar_lea.vmem [#allocation0], 6
    %v91 = vld [vmem:[%s90] ss:$8 sm:$0xf0]
    %vm92 = vcmask 1047556
    %v93 = vsel %vm92, %v91, %v89
    %94 = vrot.lane.b32.xlu0 %v93, 96
    %v95 = vpop.permute.xlu0 %94
    %vm96 = vcmask 917248
    %97 = vst.msk [vmem:[%s1] sm:$0xff] %vm96, %v95
    %s98 = scalar_lea.vmem [#allocation0], 70
    %v99 = vld [vmem:[%s98] ss:$8 sm:$0xf]
    %s100 = scalar_lea.vmem [#allocation0], 70
    %v101 = vld [vmem:[%s100] ss:$8 sm:$0xf0]
    %vm102 = vcmask 1047556
    %v103 = vsel %vm102, %v101, %v99
    %104 = vrot.lane.b32.xlu0 %v103, 96
    %v105 = vpop.permute.xlu0 %104
    %vm106 = vcmask 917248
    %s107 = scalar_lea.vmem %s1, 8
    %108 = vst.msk [vmem:[%s107] sm:$0xff] %vm106, %v105
    %s109 = scalar_lea.vmem [#allocation0], 134
    %v110 = vld [vmem:[%s109] ss:$8 sm:$0xf]
    %s111 = scalar_lea.vmem [#allocation0], 134
    %v112 = vld [vmem:[%s111] ss:$8 sm:$0xf0]
    %vm113 = vcmask 1047556
    %v114 = vsel %vm113, %v112, %v110
    %115 = vrot.lane.b32.xlu0 %v114, 96
    %v116 = vpop.permute.xlu0 %115
    %vm117 = vcmask 917248
    %s118 = scalar_lea.vmem %s1, 16
    %119 = vst.msk [vmem:[%s118] sm:$0xff] %vm117, %v116
    %s120 = scalar_lea.vmem [#allocation0], 198
    %v121 = vld [vmem:[%s120] ss:$8 sm:$0xf]
    %s122 = scalar_lea.vmem [#allocation0], 198
    %v123 = vld [vmem:[%s122] ss:$8 sm:$0xf0]
    %vm124 = vcmask 1047556
    %v125 = vsel %vm124, %v123, %v121
    %126 = vrot.lane.b32.xlu0 %v125, 96
    %v127 = vpop.permute.xlu0 %126
    %vm128 = vcmask 917248
    %s129 = scalar_lea.vmem %s1, 24
    %130 = vst.msk [vmem:[%s129] sm:$0xff] %vm128, %v127
    %s131 = scalar_lea.vmem [#allocation0], 5
    %v132 = vld [vmem:[%s131] ss:$8 sm:$0xf]
    %s133 = scalar_lea.vmem [#allocation0], 5
    %v134 = vld [vmem:[%s133] ss:$8 sm:$0xf0]
    %vm135 = vcmask 1047556
    %v136 = vsel %vm135, %v134, %v132
    %137 = vrot.lane.b32.xlu0 %v136, 80
    %v138 = vpop.permute.xlu0 %137
    %vm139 = vcmask 786048
    %140 = vst.msk [vmem:[%s1] sm:$0xff] %vm139, %v138
    %s141 = scalar_lea.vmem [#allocation0], 69
    %v142 = vld [vmem:[%s141] ss:$8 sm:$0xf]
    %s143 = scalar_lea.vmem [#allocation0], 69
    %v144 = vld [vmem:[%s143] ss:$8 sm:$0xf0]
    %vm145 = vcmask 1047556
    %v146 = vsel %vm145, %v144, %v142
    %147 = vrot.lane.b32.xlu0 %v146, 80
    %v148 = vpop.permute.xlu0 %147
    %vm149 = vcmask 786048
    %s150 = scalar_lea.vmem %s1, 8
    %151 = vst.msk [vmem:[%s150] sm:$0xff] %vm149, %v148
    %s152 = scalar_lea.vmem [#allocation0], 133
    %v153 = vld [vmem:[%s152] ss:$8 sm:$0xf]
    %s154 = scalar_lea.vmem [#allocation0], 133
    %v155 = vld [vmem:[%s154] ss:$8 sm:$0xf0]
    %vm156 = vcmask 1047556
    %v157 = vsel %vm156, %v155, %v153
    %158 = vrot.lane.b32.xlu0 %v157, 80
    %v159 = vpop.permute.xlu0 %158
    %vm160 = vcmask 786048
    %s161 = scalar_lea.vmem %s1, 16
    %162 = vst.msk [vmem:[%s161] sm:$0xff] %vm160, %v159
    %s163 = scalar_lea.vmem [#allocation0], 197
    %v164 = vld [vmem:[%s163] ss:$8 sm:$0xf]
    %s165 = scalar_lea.vmem [#allocation0], 197
    %v166 = vld [vmem:[%s165] ss:$8 sm:$0xf0]
    %vm167 = vcmask 1047556
    %v168 = vsel %vm167, %v166, %v164
    %169 = vrot.lane.b32.xlu0 %v168, 80
    %v170 = vpop.permute.xlu0 %169
    %vm171 = vcmask 786048
    %s172 = scalar_lea.vmem %s1, 24
    %173 = vst.msk [vmem:[%s172] sm:$0xff] %vm171, %v170
    %s174 = scalar_lea.vmem [#allocation0], 4
    %v175 = vld [vmem:[%s174] ss:$8 sm:$0xf]
    %s176 = scalar_lea.vmem [#allocation0], 4
    %v177 = vld [vmem:[%s176] ss:$8 sm:$0xf0]
    %vm178 = vcmask 1047556
    %v179 = vsel %vm178, %v177, %v175
    %180 = vrot.lane.b32.xlu0 %v179, 64
    %v181 = vpop.permute.xlu0 %180
    %vm182 = vcmask 654848
    %183 = vst.msk [vmem:[%s1] sm:$0xff] %vm182, %v181
    %s184 = scalar_lea.vmem [#allocation0], 68
    %v185 = vld [vmem:[%s184] ss:$8 sm:$0xf]
    %s186 = scalar_lea.vmem [#allocation0], 68
    %v187 = vld [vmem:[%s186] ss:$8 sm:$0xf0]
    %vm188 = vcmask 1047556
    %v189 = vsel %vm188, %v187, %v185
    %190 = vrot.lane.b32.xlu0 %v189, 64
    %v191 = vpop.permute.xlu0 %190
    %vm192 = vcmask 654848
    %s193 = scalar_lea.vmem %s1, 8
    %194 = vst.msk [vmem:[%s193] sm:$0xff] %vm192, %v191
    %s195 = scalar_lea.vmem [#allocation0], 132
    %v196 = vld [vmem:[%s195] ss:$8 sm:$0xf]
    %s197 = scalar_lea.vmem [#allocation0], 132
    %v198 = vld [vmem:[%s197] ss:$8 sm:$0xf0]
    %vm199 = vcmask 1047556
    %v200 = vsel %vm199, %v198, %v196
    %201 = vrot.lane.b32.xlu0 %v200, 64
    %v202 = vpop.permute.xlu0 %201
    %vm203 = vcmask 654848
    %s204 = scalar_lea.vmem %s1, 16
    %205 = vst.msk [vmem:[%s204] sm:$0xff] %vm203, %v202
    %s206 = scalar_lea.vmem [#allocation0], 196
    %v207 = vld [vmem:[%s206] ss:$8 sm:$0xf]
    %s208 = scalar_lea.vmem [#allocation0], 196
    %v209 = vld [vmem:[%s208] ss:$8 sm:$0xf0]
    %vm210 = vcmask 1047556
    %v211 = vsel %vm210, %v209, %v207
    %212 = vrot.lane.b32.xlu0 %v211, 64
    %v213 = vpop.permute.xlu0 %212
    %vm214 = vcmask 654848
    %s215 = scalar_lea.vmem %s1, 24
    %216 = vst.msk [vmem:[%s215] sm:$0xff] %vm214, %v213
    %s217 = scalar_lea.vmem [#allocation0], 3
    %v218 = vld [vmem:[%s217] ss:$8 sm:$0xf]
    %s219 = scalar_lea.vmem [#allocation0], 3
    %v220 = vld [vmem:[%s219] ss:$8 sm:$0xf0]
    %vm221 = vcmask 1047556
    %v222 = vsel %vm221, %v220, %v218
    %223 = vrot.lane.b32.xlu0 %v222, 48
    %v224 = vpop.permute.xlu0 %223
    %vm225 = vcmask 523648
    %226 = vst.msk [vmem:[%s1] sm:$0xff] %vm225, %v224
    %s227 = scalar_lea.vmem [#allocation0], 67
    %v228 = vld [vmem:[%s227] ss:$8 sm:$0xf]
    %s229 = scalar_lea.vmem [#allocation0], 67
    %v230 = vld [vmem:[%s229] ss:$8 sm:$0xf0]
    %vm231 = vcmask 1047556
    %v232 = vsel %vm231, %v230, %v228
    %233 = vrot.lane.b32.xlu0 %v232, 48
    %v234 = vpop.permute.xlu0 %233
    %vm235 = vcmask 523648
    %s236 = scalar_lea.vmem %s1, 8
    %237 = vst.msk [vmem:[%s236] sm:$0xff] %vm235, %v234
    %s238 = scalar_lea.vmem [#allocation0], 131
    %v239 = vld [vmem:[%s238] ss:$8 sm:$0xf]
    %s240 = scalar_lea.vmem [#allocation0], 131
    %v241 = vld [vmem:[%s240] ss:$8 sm:$0xf0]
    %vm242 = vcmask 1047556
    %v243 = vsel %vm242, %v241, %v239
    %244 = vrot.lane.b32.xlu0 %v243, 48
    %v245 = vpop.permute.xlu0 %244
    %vm246 = vcmask 523648
    %s247 = scalar_lea.vmem %s1, 16
    %248 = vst.msk [vmem:[%s247] sm:$0xff] %vm246, %v245
    %s249 = scalar_lea.vmem [#allocation0], 195
    %v250 = vld [vmem:[%s249] ss:$8 sm:$0xf]
    %s251 = scalar_lea.vmem [#allocation0], 195
    %v252 = vld [vmem:[%s251] ss:$8 sm:$0xf0]
    %vm253 = vcmask 1047556
    %v254 = vsel %vm253, %v252, %v250
    %255 = vrot.lane.b32.xlu0 %v254, 48
    %v256 = vpop.permute.xlu0 %255
    %vm257 = vcmask 523648
    %s258 = scalar_lea.vmem %s1, 24
    %259 = vst.msk [vmem:[%s258] sm:$0xff] %vm257, %v256
    %s260 = scalar_lea.vmem [#allocation0], 2
    %v261 = vld [vmem:[%s260] ss:$8 sm:$0xf]
    %s262 = scalar_lea.vmem [#allocation0], 2
    %v263 = vld [vmem:[%s262] ss:$8 sm:$0xf0]
    %vm264 = vcmask 1047556
    %v265 = vsel %vm264, %v263, %v261
    %266 = vrot.lane.b32.xlu0 %v265, 32
    %v267 = vpop.permute.xlu0 %266
    %vm268 = vcmask 392448
    %269 = vst.msk [vmem:[%s1] sm:$0xff] %vm268, %v267
    %s270 = scalar_lea.vmem [#allocation0], 66
    %v271 = vld [vmem:[%s270] ss:$8 sm:$0xf]
    %s272 = scalar_lea.vmem [#allocation0], 66
    %v273 = vld [vmem:[%s272] ss:$8 sm:$0xf0]
    %vm274 = vcmask 1047556
    %v275 = vsel %vm274, %v273, %v271
    %276 = vrot.lane.b32.xlu0 %v275, 32
    %v277 = vpop.permute.xlu0 %276
    %vm278 = vcmask 392448
    %s279 = scalar_lea.vmem %s1, 8
    %280 = vst.msk [vmem:[%s279] sm:$0xff] %vm278, %v277
    %s281 = scalar_lea.vmem [#allocation0], 130
    %v282 = vld [vmem:[%s281] ss:$8 sm:$0xf]
    %s283 = scalar_lea.vmem [#allocation0], 130
    %v284 = vld [vmem:[%s283] ss:$8 sm:$0xf0]
    %vm285 = vcmask 1047556
    %v286 = vsel %vm285, %v284, %v282
    %287 = vrot.lane.b32.xlu0 %v286, 32
    %v288 = vpop.permute.xlu0 %287
    %vm289 = vcmask 392448
    %s290 = scalar_lea.vmem %s1, 16
    %291 = vst.msk [vmem:[%s290] sm:$0xff] %vm289, %v288
    %s292 = scalar_lea.vmem [#allocation0], 194
    %v293 = vld [vmem:[%s292] ss:$8 sm:$0xf]
    %s294 = scalar_lea.vmem [#allocation0], 194
    %v295 = vld [vmem:[%s294] ss:$8 sm:$0xf0]
    %vm296 = vcmask 1047556
    %v297 = vsel %vm296, %v295, %v293
    %298 = vrot.lane.b32.xlu0 %v297, 32
    %v299 = vpop.permute.xlu0 %298
    %vm300 = vcmask 392448
    %s301 = scalar_lea.vmem %s1, 24
    %302 = vst.msk [vmem:[%s301] sm:$0xff] %vm300, %v299
    %s303 = scalar_lea.vmem [#allocation0], 1
    %v304 = vld [vmem:[%s303] ss:$8 sm:$0xf]
    %s305 = scalar_lea.vmem [#allocation0], 1
    %v306 = vld [vmem:[%s305] ss:$8 sm:$0xf0]
    %vm307 = vcmask 1047556
    %v308 = vsel %vm307, %v306, %v304
    %309 = vrot.lane.b32.xlu0 %v308, 16
    %v310 = vpop.permute.xlu0 %309
    %vm311 = vcmask 261248
    %312 = vst.msk [vmem:[%s1] sm:$0xff] %vm311, %v310
    %s313 = scalar_lea.vmem [#allocation0], 65
    %v314 = vld [vmem:[%s313] ss:$8 sm:$0xf]
    %s315 = scalar_lea.vmem [#allocation0], 65
    %v316 = vld [vmem:[%s315] ss:$8 sm:$0xf0]
    %vm317 = vcmask 1047556
    %v318 = vsel %vm317, %v316, %v314
    %319 = vrot.lane.b32.xlu0 %v318, 16
    %v320 = vpop.permute.xlu0 %319
    %vm321 = vcmask 261248
    %s322 = scalar_lea.vmem %s1, 8
    %323 = vst.msk [vmem:[%s322] sm:$0xff] %vm321, %v320
    %s324 = scalar_lea.vmem [#allocation0], 129
    %v325 = vld [vmem:[%s324] ss:$8 sm:$0xf]
    %s326 = scalar_lea.vmem [#allocation0], 129
    %v327 = vld [vmem:[%s326] ss:$8 sm:$0xf0]
    %vm328 = vcmask 1047556
    %v329 = vsel %vm328, %v327, %v325
    %330 = vrot.lane.b32.xlu0 %v329, 16
    %v331 = vpop.permute.xlu0 %330
    %vm332 = vcmask 261248
    %s333 = scalar_lea.vmem %s1, 16
    %334 = vst.msk [vmem:[%s333] sm:$0xff] %vm332, %v331
    %s335 = scalar_lea.vmem [#allocation0], 193
    %v336 = vld [vmem:[%s335] ss:$8 sm:$0xf]
    %s337 = scalar_lea.vmem [#allocation0], 193
    %v338 = vld [vmem:[%s337] ss:$8 sm:$0xf0]
    %vm339 = vcmask 1047556
    %v340 = vsel %vm339, %v338, %v336
    %341 = vrot.lane.b32.xlu0 %v340, 16
    %v342 = vpop.permute.xlu0 %341
    %vm343 = vcmask 261248
    %s344 = scalar_lea.vmem %s1, 24
    %345 = vst.msk [vmem:[%s344] sm:$0xff] %vm343, %v342
    %346 = vsyncpa [#allocation1], 1

// kernel: tversky_loss.1
$region0: #{tversky_loss.1}
  #allocation0 [shape = 'u32[]', space=smem, size = 0x4, offset = 0x4, fixed_abs, tag = 'smem constant byte address 0x4 - core index']
  #allocation1 [shape = 'u32[144,128]{1,0:T(1,128)}', space=vmem, size = 0x12000, scoped, tag = 'internal scratch']
  #allocation2 [shape = 'f32[1,128]{1,0:T(1,128)}', space=vmem, size = 0x200, scoped, tag = 'scratch operand']
  #allocation3 [shape = 'f32[1,128]{1,0:T(1,128)}', space=vmem, size = 0x200, scoped, tag = 'scratch operand']
  #allocation4 [shape = 'f32[1,128]{1,0:T(1,128)}', space=vmem, size = 0x200, scoped, tag = 'scratch operand']
  %s0 = inlined_call_operand.vmem [shape: f32[2,16,128], index: 0, kind: input, shape index: {}]
  %s1 = inlined_call_operand.vmem [shape: f32[2,16,128], index: 1, kind: input, shape index: {}]
  %s2 = inlined_call_operand.vmem [shape: f32[2,3,128], index: 2, kind: output, shape index: {}]
  %s3 = sld [smem:[#allocation0]]
  $region49: #{tversky_loss.1} parent=0
    _
  %s5 = ssub.s32 1, %s3
  %s6 = scalar_select 0, %s5, %s3
  loop: start=0, step=1, limit=4
  $region2: #{tversky_loss.1} parent=0 // loop_pre_header
    _
  $region3: #{tversky_loss.1} parent=0 // loop_header
    %s8 = sphi 0, %s12
    %p9 = scmp.ge.s32.totalorder %s8, 4
    %s15 = sphi 0, %s27
    %s16 = sphi 0, %s23
    %s17 = sphi 0, %s15
    %s18 = sphi 0, %s16
    %s19 = sphi 0, %s17
    %s20 = sphi 0, %s18
    %s32 = sphi 0, %s34
    %s35 = sphi 0, %s32
    %s36 = sphi 0, %s35
    %s52 = sphi 0, %s36
    %s60 = sphi 0, %s62
    %s63 = sphi 0, %s60
    %s64 = sphi 0, %s63
    %s80 = sphi 0, %s64
    %s86 = sphi 0, %s88
    %s89 = sphi 0, %s86
    %s90 = sphi 0, %s89
    %s106 = sphi 0, %s90
  $region4: #{tversky_loss.1} parent=0 // loop_header_branch
    %11 = sbr.rel (%p9) target = $region8
  $region5: #{tversky_loss.1} parent=0 // loop_body
    %s13 = ssub.s32 %s8, 1
    %s14 = ssub.s32 %s8, 2
    %s21 = sadd.s32 1, %s16
    %p22 = scmp.ge.s32.totalorder %s21, 1
    %s23 = scalar_select %p22, 0, %s21
    %s24 = sadd.s32 1, %s15
    %s25 = scalar_select %p22, %s24, %s15
    %p26 = scmp.ge.s32.totalorder %s25, 2
    %s27 = scalar_select %p26, 0, %s25
    %s28 = ssub.s32 %s15, %s27
    %s29 = ssub.s32 %s16, %s23
    %s30 = sor.u32 %s28, %s29
    %p31 = scmp.eq.s32.totalorder %s30, 0
    %s33 = sadd.s32 %s32, 1
    %s34 = scalar_select %p31, %s32, %s33
    %p37 = pneg %p31
    %p38 = scmp.eq.s32.totalorder %s8, 1
    %p39 = por %p37, %p38
    %p40 = scmp.ne.s32.totalorder %s32, %s35
    %p41 = scmp.eq.s32.totalorder %s8, 0
    %p42 = por %p40, %p41
    %p43 = scmp.ne.s32.totalorder %s32, %s35
    %p44 = scmp.eq.s32.totalorder %s13, 1
    %p45 = por %p43, %p44
    %p46 = scmp.ne.s32.totalorder %s35, %s36
    %p47 = scmp.eq.s32.totalorder %s13, 0
    %p48 = por %p46, %p47
    %p49 = scmp.ne.s32.totalorder %s35, %s36
    %p50 = scmp.eq.s32.totalorder %s14, 1
    %p51 = por %p49, %p50
    %p53 = scmp.ne.s32.totalorder %s36, %s52
    %p54 = scmp.eq.s32.totalorder %s14, 0
    %p55 = por %p53, %p54
    %s56 = ssub.s32 %s15, %s27
    %s57 = ssub.s32 %s16, %s23
    %s58 = sor.u32 %s56, %s57
    %p59 = scmp.eq.s32.totalorder %s58, 0
    %s61 = sadd.s32 %s60, 1
    %s62 = scalar_select %p59, %s60, %s61
    %p65 = pneg %p59
    %p66 = scmp.eq.s32.totalorder %s8, 1
    %p67 = por %p65, %p66
    %p68 = scmp.ne.s32.totalorder %s60, %s63
    %p69 = scmp.eq.s32.totalorder %s8, 0
    %p70 = por %p68, %p69
    %p71 = scmp.ne.s32.totalorder %s60, %s63
    %p72 = scmp.eq.s32.totalorder %s13, 1
    %p73 = por %p71, %p72
    %p74 = scmp.ne.s32.totalorder %s63, %s64
    %p75 = scmp.eq.s32.totalorder %s13, 0
    %p76 = por %p74, %p75
    %p77 = scmp.ne.s32.totalorder %s63, %s64
    %p78 = scmp.eq.s32.totalorder %s14, 1
    %p79 = por %p77, %p78
    %p81 = scmp.ne.s32.totalorder %s64, %s80
    %p82 = scmp.eq.s32.totalorder %s14, 0
    %p83 = por %p81, %p82
    %s84 = ssub.s32 %s15, %s27
    %p85 = scmp.eq.s32.totalorder %s84, 0
    %s87 = sadd.s32 %s86, 1
    %s88 = scalar_select %p85, %s86, %s87
    %p91 = pneg %p85
    %p92 = scmp.eq.s32.totalorder %s8, 1
    %p93 = por %p91, %p92
    %p94 = scmp.ne.s32.totalorder %s86, %s89
    %p95 = scmp.eq.s32.totalorder %s8, 0
    %p96 = por %p94, %p95
    %p97 = scmp.ne.s32.totalorder %s86, %s89
    %p98 = scmp.eq.s32.totalorder %s13, 1
    %p99 = por %p97, %p98
    %p100 = scmp.ne.s32.totalorder %s89, %s90
    %p101 = scmp.eq.s32.totalorder %s13, 0
    %p102 = por %p100, %p101
    %p103 = scmp.ne.s32.totalorder %s89, %s90
    %p104 = scmp.eq.s32.totalorder %s14, 1
    %p105 = por %p103, %p104
    %p107 = scmp.ne.s32.totalorder %s90, %s106
    %p108 = scmp.eq.s32.totalorder %s14, 0
    %p109 = por %p107, %p108
    %p110 = scmp.le.s32.totalorder 1, %s8
    %p111 = scmp.lt.s32.totalorder %s8, 3
    %p112 = pnand %p110, %p111
    %p113 = pneg %p112
    // Predicated region
    $region9: #{tversky_loss.1} parent=5 // pred_check
      _
    $region10: #{tversky_loss.1} parent=5 // pred_check_branch
      %115 = sbr.rel (%p112) target = $region12
    $region11: #{tversky_loss.1} parent=5 // pred_region
      %s116 = ssub.s32 %s8, 1
    $region12: #{tversky_loss.1} parent=5 // pred_fallthru
      _
    %p117 = scmp.lt.s32.totalorder %s8, 2
    // Predicated region
    $region13: #{tversky_loss.1} parent=5 // pred_check
      %p118 = pneg %p117
    $region14: #{tversky_loss.1} parent=5 // pred_check_branch
      %120 = sbr.rel (%p118) target = $region16
    $region15: #{tversky_loss.1} parent=5 // pred_region
      // Predicated region
      $region17: #{tversky_loss.1} parent=15 // pred_check
        %p121 = pneg %p42
      $region18: #{tversky_loss.1} parent=15 // pred_check_branch
        %123 = sbr.rel (%p121) target = $region20
      $region19: #{tversky_loss.1} parent=15 // pred_region
        %s124 = smul.u32 2, %s16
        %p125 = scmp.lt.s32.totalorder %s15, 1
        %s126 = scalar_select %p125, %s15, 1
        %p127 = scmp.lt.s32.totalorder %s124, 1
        %s128 = scalar_select %p127, %s124, 1
        %s129 = smul.addr %s126, 2
        %s130 = sadd.s32 %s128, %s129
        %s131 = smul.addr %s130, 8
        %s132 = scalar_lea.vmem %s0, %s131
        %s133 = smul.u32 2, %s16
      $region20: #{tversky_loss.1} parent=15 // pred_fallthru
        _
      // Predicated region
      $region21: #{tversky_loss.1} parent=15 // pred_check
        %p134 = pneg %p70
      $region22: #{tversky_loss.1} parent=15 // pred_check_branch
        %136 = sbr.rel (%p134) target = $region24
      $region23: #{tversky_loss.1} parent=15 // pred_region
        %s137 = smul.u32 2, %s16
        %p138 = scmp.lt.s32.totalorder %s15, 1
        %s139 = scalar_select %p138, %s15, 1
        %p140 = scmp.lt.s32.totalorder %s137, 1
        %s141 = scalar_select %p140, %s137, 1
        %s142 = smul.addr %s139, 2
        %s143 = sadd.s32 %s141, %s142
        %s144 = smul.addr %s143, 8
        %s145 = scalar_lea.vmem %s1, %s144
        %s146 = smul.u32 2, %s16
      $region24: #{tversky_loss.1} parent=15 // pred_fallthru
        _
    $region16: #{tversky_loss.1} parent=5 // pred_fallthru
      _
    %p147 = scmp.le.s32.totalorder 1, %s8
    %p148 = scmp.lt.s32.totalorder %s8, 3
    %p149 = pnand %p147, %p148
    %p150 = pneg %p149
    // Predicated region
    $region25: #{tversky_loss.1} parent=5 // pred_check
      _
    $region26: #{tversky_loss.1} parent=5 // pred_check_branch
      %152 = sbr.rel (%p149) target = $region28
    $region27: #{tversky_loss.1} parent=5 // pred_region
      %s153 = ssub.s32 %s8, 1
      %s154 = smul.u32 2, %s18
      %p155 = scmp.lt.s32.totalorder %s17, 1
      %s156 = scalar_select %p155, %s17, 1
      %p157 = scmp.lt.s32.totalorder %s154, 1
      %s158 = scalar_select %p157, %s154, 1
      %s159 = smul.addr %s156, 2
      %s160 = sadd.s32 %s158, %s159
      %s161 = smul.addr %s160, 8
      %s162 = scalar_lea.vmem %s0, %s161
      %p163 = pneg %p48
      %p164 = pneg %p45
      %s165 = smul.u32 2, %s18
      %p166 = scmp.lt.s32.totalorder %s17, 1
      %s167 = scalar_select %p166, %s17, 1
      %p168 = scmp.lt.s32.totalorder %s165, 1
      %s169 = scalar_select %p168, %s165, 1
      %s170 = smul.addr %s167, 2
      %s171 = sadd.s32 %s169, %s170
      %s172 = smul.addr %s171, 8
      %s173 = scalar_lea.vmem %s1, %s172
      %p174 = pneg %p76
      %p175 = pneg %p73
      %p176 = pneg %p102
      %p177 = pneg %p99
      %p178 = scmp.lt.s32.totalorder %s17, 1
      %s179 = scalar_select %p178, %s17, 1
      %s180 = smul.addr %s179, 4
      %s181 = scalar_lea.vmem %s2, %s180
      %s182 = smul.u32 2, %s18
      %p183 = scmp.lt.s32.totalorder %s17, 1
      %s184 = scalar_select %p183, %s17, 1
      %p185 = scmp.lt.s32.totalorder %s182, 1
      %s186 = scalar_select %p185, %s182, 1
      %s187 = smul.addr %s184, 2
      %s188 = sadd.s32 %s186, %s187
      %s189 = smul.addr %s188, 8
      %s190 = scalar_lea.vmem %s0, %s189
      %s191 = smul.u32 2, %s18
      %s192 = smul.u32 2, %s18
      %p193 = scmp.lt.s32.totalorder %s17, 1
      %s194 = scalar_select %p193, %s17, 1
      %p195 = scmp.lt.s32.totalorder %s192, 1
      %s196 = scalar_select %p195, %s192, 1
      %s197 = smul.addr %s194, 2
      %s198 = sadd.s32 %s196, %s197
      %s199 = smul.addr %s198, 8
      %s200 = scalar_lea.vmem %s1, %s199
      %s201 = smul.u32 2, %s18
      %p202 = scmp.lt.s32.totalorder %s17, 1
      %s203 = scalar_select %p202, %s17, 1
      %s204 = smul.addr %s203, 4
      %s205 = scalar_lea.vmem %s2, %s204
      %p206 = scmp.eq.s32.totalorder %s18, 0
      // Predicated region
      $region29: #{tversky_loss.1} parent=27 // pred_check
        %p207 = pneg %p206
      $region30: #{tversky_loss.1} parent=27 // pred_check_branch
        %209 = sbr.rel (%p207) target = $region32
      $region31: #{tversky_loss.1} parent=27 // pred_region
        %210 = vst [vmem:[#allocation2] sm:$0x1] 0.0
        %211 = vst [vmem:[#allocation3] sm:$0x1] 0.0
        %212 = vst [vmem:[#allocation4] sm:$0x1] 0.0
      $region32: #{tversky_loss.1} parent=27 // pred_fallthru
        _
      %v213 = vld [vmem:[%s190] sm:$0xff]
      %v214 = vld [vmem:[%s190 + $0x8] sm:$0xff]
      %v215 = vld [vmem:[%s200] sm:$0xff]
      %v216 = vld [vmem:[%s200 + $0x8] sm:$0xff]
      %v217 = vld [vmem:[#allocation2] sm:$0x1]
      %v218 = vmul.f32 %v213, %v215
      %v219 = vmul.f32 %v214, %v216
      %v220 = vadd.f32 %v218, %v219
      %v221 = vrot.slane %v220, 4
      %v222 = vadd.f32 %v220, %v221
      %v223 = vrot.slane %v222, 2
      %v224 = vadd.f32 %v222, %v223
      %v225 = vrot.slane %v224, 1
      %v226 = vadd.f32 %v224, %v225
      %v227 = vadd.f32 %v217, %v226
      %228 = vst [vmem:[#allocation2] sm:$0x1] %v227
      %v229 = vld [vmem:[#allocation3] sm:$0x1]
      %v230 = vsub.f32 1.0, %v215
      %v231 = vsub.f32 1.0, %v216
      %v232 = vmul.f32 %v213, %v230
      %v233 = vmul.f32 %v214, %v231
      %v234 = vadd.f32 %v232, %v233
      %v235 = vrot.slane %v234, 4
      %v236 = vadd.f32 %v234, %v235
      %v237 = vrot.slane %v236, 2
      %v238 = vadd.f32 %v236, %v237
      %v239 = vrot.slane %v238, 1
      %v240 = vadd.f32 %v238, %v239
      %v241 = vadd.f32 %v229, %v240
      %242 = vst [vmem:[#allocation3] sm:$0x1] %v241
      %v243 = vld [vmem:[#allocation4] sm:$0x1]
      %v244 = vsub.f32 1.0, %v213
      %v245 = vsub.f32 1.0, %v214
      %v246 = vmul.f32 %v244, %v215
      %v247 = vmul.f32 %v245, %v216
      %v248 = vadd.f32 %v246, %v247
      %v249 = vrot.slane %v248, 4
      %v250 = vadd.f32 %v248, %v249
      %v251 = vrot.slane %v250, 2
      %v252 = vadd.f32 %v250, %v251
      %v253 = vrot.slane %v252, 1
      %v254 = vadd.f32 %v252, %v253
      %v255 = vadd.f32 %v243, %v254
      %256 = vst [vmem:[#allocation4] sm:$0x1] %v255
      // Predicated region
      $region33: #{tversky_loss.1} parent=27 // pred_check
        %p257 = pneg %p206
      $region34: #{tversky_loss.1} parent=27 // pred_check_branch
        %259 = sbr.rel (%p257) target = $region36
      $region35: #{tversky_loss.1} parent=27 // pred_region
        %v260 = vld [vmem:[#allocation2] sm:$0x1]
        %v261 = vld [vmem:[#allocation3] sm:$0x1]
        %v262 = vld [vmem:[#allocation4] sm:$0x1]
        %v264 = vlaneseq
        %v265 = vshrl.u32 %v264, 7
        %v266 = vsub.s32 0, %v265
        %v267 = vrot.slane %v261, %v266
        %v270 = vlaneseq
        %v271 = vshrl.u32 %v270, 7
        %v272 = vsub.s32 0, %v271
        %v273 = vrot.slane %v262, %v272
        %vm275 = vcmask 1040384
        %v276 = vsel %vm275, %v260, %v267
        %vm277 = vcmask 1041408
        %v278 = vsel %vm277, %v276, %v273
        %279 = vst [vmem:[%s205] sm:$0x7] %v278
      $region36: #{tversky_loss.1} parent=27 // pred_fallthru
        _
      %p280 = scmp.lt.s32.totalorder %s17, 1
      %s281 = scalar_select %p280, %s17, 1
      %s282 = smul.addr %s281, 4
      %s283 = scalar_lea.vmem %s2, %s282
      // Predicated region
      $region37: #{tversky_loss.1} parent=27 // pred_check
        %p284 = pneg %p99
      $region38: #{tversky_loss.1} parent=27 // pred_check_branch
        %286 = sbr.rel (%p284) target = $region40
      $region39: #{tversky_loss.1} parent=27 // pred_region
        _
      $region40: #{tversky_loss.1} parent=27 // pred_fallthru
        _
    $region28: #{tversky_loss.1} parent=5 // pred_fallthru
      _
    %p287 = scmp.le.s32.totalorder 2, %s8
    // Predicated region
    $region41: #{tversky_loss.1} parent=5 // pred_check
      %p288 = pneg %p287
    $region42: #{tversky_loss.1} parent=5 // pred_check_branch
      %290 = sbr.rel (%p288) target = $region44
    $region43: #{tversky_loss.1} parent=5 // pred_region
      %s291 = ssub.s32 %s8, 2
      // Predicated region
      $region45: #{tversky_loss.1} parent=43 // pred_check
        %p292 = pneg %p105
      $region46: #{tversky_loss.1} parent=43 // pred_check_branch
        %294 = sbr.rel (%p292) target = $region48
      $region47: #{tversky_loss.1} parent=43 // pred_region
        %p295 = scmp.lt.s32.totalorder %s19, 1
        %s296 = scalar_select %p295, %s19, 1
        %s297 = smul.addr %s296, 4
        %s298 = scalar_lea.vmem %s2, %s297
      $region48: #{tversky_loss.1} parent=43 // pred_fallthru
        _
    $region44: #{tversky_loss.1} parent=5 // pred_fallthru
      _
  $region6: #{tversky_loss.1} parent=0 // loop_footer
    %s12 = sadd.s32 1, %s8
  $region7: #{tversky_loss.1} parent=0 // loop_footer_branch
    %7 = sbr.rel target = $region3
  $region8: #{tversky_loss.1} parent=0 // loop_exit
    _

</llo_original>
